<compile_context>
chip_gen: v6e
topology: v6e:2x2x1
jax: 0.10.0
libtpu: 0.0.40
codegen_flags: <defaults>
</compile_context>

<pallas_src>
import functools
import math

import jax
import jax.numpy as jnp
from jax import lax
from jax.experimental import pallas as pl
from jax.experimental.pallas import tpu as pltpu

MASK_SCORE = -1000000000000000.0  # same constant as the PyTorch module
LOG_2PI = math.log(2.0 * math.pi)


def _vmem_footprint_bytes(tT, N, Hp, H, x_bytes, out_bytes):
    """Rough per-call VMEM footprint (double-buffered blocks + live temporaries)."""
    x_blk = 2 * N * Hp * x_bytes          # resident (N, Hp) input block (x2 buffers)
    vecs = 2 * 2 * N * 4                  # centers + mask-bias (1, N) f32 blocks
    out_blk = 2 * tT * H * out_bytes      # output (tT, H) block (x2 buffers)
    temps = 6 * tT * N * 4 + 2 * tT * Hp * 4   # diff/w/e (tT,N) + acc/out (tT,Hp) f32
    return x_blk + vecs + out_blk + temps


def _pick_time_tile(T, N, Hp, H, x_bytes, out_bytes):
    """Choose the time tile + vmem limit from footprint and chip VMEM capacity."""
    try:
        vmem_cap = int(pltpu.get_tpu_info().vmem_capacity_bytes)
    except Exception:  # be conservative if the query is unavailable
        vmem_cap = 64 * 1024 * 1024
    big_vmem = vmem_cap > (64 << 20)          # v5e/v6e (128 MiB) vs v7x (64 MiB)
    budget = (96 << 20) if big_vmem else (40 << 20)
    cands = (1024, 512, 256, 128, 64, 32, 16, 8) if big_vmem else (512, 256, 128, 64, 32, 16, 8)

    tile_cap = 8
    for cand in cands:  # largest multiple-of-8 tile whose footprint fits the budget
        if _vmem_footprint_bytes(cand, N, Hp, H, x_bytes, out_bytes) <= budget:
            tile_cap = cand
            break

    # Small T: a single full-T tile (block dim == array dim is always legal).
    tT = T if T <= tile_cap else tile_cap
    est = _vmem_footprint_bytes(tT, N, Hp, H, x_bytes, out_bytes)
    vmem_limit = int(min(budget, max(est * 1.3 + (4 << 20), 32 << 20)))
    return tT, vmem_limit


def _gaussian_upsampling_kernel(c_ref, bias_ref, x_ref, o_ref, *,
                                inv_two_var, tT, H, ones_col):
    # c_ref    : VMEM (1, 1, N)  f32   phoneme centers
    # bias_ref : VMEM (1, 1, N)  f32   additive length mask (0 / MASK_SCORE)
    # x_ref    : VMEM (1, N, Hp) bf16  inputs (resident across the time loop)
    # o_ref    : VMEM (1, tT, H)       output time tile
    t0 = pl.program_id(1) * tT

    c = c_ref[0]                                                   # (1, N) f32
    bias = bias_ref[0]                                             # (1, N) f32

    # Gaussian log-weights (softmax is shift invariant -> constants dropped):
    #   w[t, n] = -(0.5/var) * (t - c_n)^2 + mask_bias_n
    t_col = (lax.broadcasted_iota(jnp.int32, (tT, 1), 0) + t0).astype(jnp.float32)
    diff = t_col - c                                               # (tT, N)
    w = diff * diff * jnp.float32(-inv_two_var) + bias             # (tT, N)

    # numerically-stable softmax over the phoneme axis, normalization deferred
    w = w - jnp.max(w, axis=1, keepdims=True)
    e = jnp.exp(w)                                                 # (tT, N) f32
    e16 = e.astype(jnp.bfloat16)

    # upsample: (tT, N) @ (N, Hp) on the MXU in bf16 with f32 accumulation.
    x = x_ref[0]                                                   # (N, Hp) bf16
    acc = jnp.dot(e16, x, preferred_element_type=jnp.float32)      # (tT, Hp) f32

    if ones_col:
        # column H of x is all ones -> softmax denominator comes out of the MXU
        # (consistent with the bf16-rounded weights actually used above).
        s = acc[:, H:H + 1]                                        # (tT, 1)
        out = acc[:, :H] * pl.reciprocal(s, approx=True)
    else:
        s = jnp.sum(e, axis=1, keepdims=True)                      # (tT, 1)
        out = acc * pl.reciprocal(s, approx=True)
    o_ref[0] = out.astype(o_ref.dtype)


def gaussian_upsampling(inputs, inputs_len, durations, output_max_len,
                        variance=1.0, out_dtype=None):
    """inputs: [B, N, H], inputs_len: [B] int, durations: [B, N].
    Returns [B, T, H] with T = output_max_len (matches the PyTorch module).
    Pass out_dtype=jnp.bfloat16 to halve the dominant HBM write traffic if the
    consumer tolerates it (compute precision is already bf16-MXU-limited)."""
    B, N, H = inputs.shape
    T = int(output_max_len)
    out_dtype = inputs.dtype if out_dtype is None else out_dtype
    out_bytes = jnp.dtype(out_dtype).itemsize

    # phoneme centers precomputed outside the kernel: [B, 1, N] f32
    dur = durations.astype(jnp.float32)
    centers = (jnp.cumsum(dur, axis=1) - 0.5 * dur)[:, None, :]

    # per-batch additive length-mask bias: [B, 1, N] f32 (0 or MASK_SCORE)
    n_ids = jnp.arange(N, dtype=jnp.int32)[None, :]
    mask_bias = jnp.where(n_ids >= inputs_len.astype(jnp.int32)[:, None],
                          jnp.float32(MASK_SCORE),
                          jnp.float32(0.0))[:, None, :].astype(jnp.float32)

    # lane-dense hidden dim for the MXU: pad H up to a multiple of 128 and
    # pre-cast to bf16 once in the wrapper.  When a spare padded column exists,
    # set column H to 1.0 so the matmul also produces the softmax denominator.
    Hp = max(128, ((H + 127) // 128) * 128)
    ones_col = Hp > H
    x_bf = inputs.astype(jnp.bfloat16)
    if ones_col:
        x_bf = jnp.pad(x_bf, ((0, 0), (0, 0), (0, Hp - H)))
        x_bf = x_bf.at[:, :, H].set(jnp.bfloat16(1.0))

    tT, vmem_limit = _pick_time_tile(T, N, Hp, H, x_bytes=2, out_bytes=out_bytes)
    n_t_tiles = pl.cdiv(T, tT)   # ragged last tile is handled by Pallas

    kernel = functools.partial(
        _gaussian_upsampling_kernel,
        inv_two_var=0.5 / float(variance), tT=tT, H=H, ones_col=ones_col,
    )

    cost = pl.CostEstimate(
        flops=2 * B * T * N * Hp,
        transcendentals=B * T * N,
        bytes_accessed=(B * N * Hp * 2          # bf16 inputs
                        + 2 * B * N * 4         # centers + mask bias
                        + B * T * H * out_bytes),
    )

    # TODO(synk): for very large resident N*Hp on v7x, pipeline_mode=pl.Buffered(1)
    # on the x BlockSpec (block index only changes per batch) would halve its
    # VMEM allocation at the cost of one exposed DMA per batch.
    out = pl.pallas_call(
        kernel,
        out_shape=jax.ShapeDtypeStruct((B, T, H), out_dtype),
        grid_spec=pltpu.PrefetchScalarGridSpec(
            num_scalar_prefetch=0,
            grid=(B, n_t_tiles),
            in_specs=[
                pl.BlockSpec((1, 1, N), lambda b, t: (b, 0, 0)),    # centers
                pl.BlockSpec((1, 1, N), lambda b, t: (b, 0, 0)),    # mask bias
                pl.BlockSpec((1, N, Hp), lambda b, t: (b, 0, 0)),   # inputs (resident over t)
            ],
            out_specs=pl.BlockSpec((1, tT, H), lambda b, t: (b, t, 0)),
        ),
        compiler_params=pltpu.CompilerParams(
            dimension_semantics=("parallel", "parallel"),
            vmem_limit_bytes=vmem_limit,
        ),
        cost_estimate=cost,
    )(centers, mask_bias, x_bf)
    return out


def _reference(inputs, inputs_len, durations, output_max_len, variance=1.0):
    """Pure-JAX reference mirroring the PyTorch module exactly."""
    B, N, H = inputs.shape
    T = int(output_max_len)
    c = jnp.cumsum(durations.astype(jnp.float32), axis=1) - 0.5 * durations  # [B, N]
    t = jnp.arange(T, dtype=jnp.float32)[None, None, :]                      # [1, 1, T]
    w = -0.5 * (LOG_2PI + math.log(float(variance))
                + (t - c[:, :, None]) ** 2 / float(variance))                # [B, N, T]
    mask = jnp.arange(N)[None, :] >= inputs_len[:, None]                     # [B, N]
    w = jnp.where(mask[:, :, None], MASK_SCORE, w)
    w = jax.nn.softmax(w, axis=1)
    return jnp.einsum("bnt,bnh->bth", w, inputs)


if __name__ == "__main__":
    key = jax.random.PRNGKey(0)
    B, N, H, T = 2, 8, 32, 16
    k1, k2 = jax.random.split(key)

    inputs = jax.random.normal(k1, (B, N, H), dtype=jnp.float32)
    durations = jax.random.uniform(k2, (B, N), dtype=jnp.float32, minval=0.5, maxval=3.0)
    inputs_len = jnp.array([N, 5], dtype=jnp.int32)

    out = gaussian_upsampling(inputs, inputs_len, durations, T, variance=1.0)
    jax.block_until_ready(out)

    ref = _reference(inputs, inputs_len, durations, T, variance=1.0)
    assert out.shape == (B, T, H)
    # bf16 MXU weights + approximate reciprocal -> validate at a looser tolerance.
    assert jnp.allclose(out, ref, atol=2e-2, rtol=2e-2), "mismatch vs pure-JAX reference"

    print("KERNEL_OK")
</pallas_src>

<mosaic_0001>
module attributes {stable_mosaic.version = 11 : i64} {
  func.func @_gaussian_upsampling_kernel(%arg0: i32, %arg1: i32, %arg2: memref<1x1x8xf32, #tpu.memory_space<vmem>>, %arg3: memref<1x1x8xf32, #tpu.memory_space<vmem>>, %arg4: memref<1x8x128xbf16, #tpu.memory_space<vmem>>, %arg5: memref<1x16x32xf32, #tpu.memory_space<vmem>>) attributes {dimension_semantics = [#tpu.dimension_semantics<parallel>, #tpu.dimension_semantics<parallel>], iteration_bounds = array<i64: 2, 1>, scalar_prefetch = 0 : i64, scratch_operands = 0 : i64, tpu.core_type = #tpu.core_type<tc>, window_params = [{transform_indices = @transform_0, window_bounds = array<i64: 1, 1, 8>}, {transform_indices = @transform_1, window_bounds = array<i64: 1, 1, 8>}, {transform_indices = @transform_2, window_bounds = array<i64: 1, 8, 128>}, {transform_indices = @transform_3, window_bounds = array<i64: 1, 16, 32>}]} {
    %c16_i32 = arith.constant 16 : i32
    %0 = arith.muli %arg1, %c16_i32 : i32
    %c0 = arith.constant 0 : index
    %c0_0 = arith.constant 0 : index
    %c0_1 = arith.constant 0 : index
    %1 = vector.load %arg2[%c0, %c0_0, %c0_1] : memref<1x1x8xf32, #tpu.memory_space<vmem>>, vector<1x1x8xf32>
    %2 = vector.shape_cast %1 : vector<1x1x8xf32> to vector<1x8xf32>
    %c0_2 = arith.constant 0 : index
    %c0_3 = arith.constant 0 : index
    %c0_4 = arith.constant 0 : index
    %3 = vector.load %arg3[%c0_2, %c0_3, %c0_4] : memref<1x1x8xf32, #tpu.memory_space<vmem>>, vector<1x1x8xf32>
    %4 = vector.shape_cast %3 : vector<1x1x8xf32> to vector<1x8xf32>
    %5 = tpu.iota {dimensions = array<i32: 0>} : vector<16x1xi32>
    %6 = vector.broadcast %0 : i32 to vector<16x1xi32>
    %7 = arith.addi %5, %6 : vector<16x1xi32>
    %8 = arith.sitofp %7 : vector<16x1xi32> to vector<16x1xf32>
    %9 = vector.broadcast %8 : vector<16x1xf32> to vector<16x8xf32>
    %10 = vector.broadcast %2 : vector<1x8xf32> to vector<16x8xf32>
    %11 = arith.subf %9, %10 : vector<16x8xf32>
    %12 = arith.mulf %11, %11 : vector<16x8xf32>
    %cst = arith.constant -5.000000e-01 : f32
    %13 = vector.broadcast %cst : f32 to vector<16x8xf32>
    %14 = arith.mulf %12, %13 : vector<16x8xf32>
    %15 = vector.broadcast %4 : vector<1x8xf32> to vector<16x8xf32>
    %16 = arith.addf %14, %15 : vector<16x8xf32>
    %cst_5 = arith.constant dense<0xFF800000> : vector<16xf32>
    %17 = vector.multi_reduction <maximumf>, %16, %cst_5 [1] : vector<16x8xf32> to vector<16xf32>
    %18 = vector.shape_cast %17 : vector<16xf32> to vector<16x1xf32>
    %19 = vector.broadcast %18 : vector<16x1xf32> to vector<16x8xf32>
    %20 = arith.subf %16, %19 : vector<16x8xf32>
    %21 = math.exp %20 : vector<16x8xf32>
    %22 = arith.truncf %21 : vector<16x8xf32> to vector<16x8xbf16>
    %c0_6 = arith.constant 0 : index
    %c0_7 = arith.constant 0 : index
    %c0_8 = arith.constant 0 : index
    %23 = vector.load %arg4[%c0_6, %c0_7, %c0_8] : memref<1x8x128xbf16, #tpu.memory_space<vmem>>, vector<1x8x128xbf16>
    %24 = vector.shape_cast %23 : vector<1x8x128xbf16> to vector<8x128xbf16>
    %cst_9 = arith.constant dense<0.000000e+00> : vector<16x128xf32>
    %25 = tpu.matmul %22, %24, %cst_9 {dimension_numbers = #tpu.dot_dimension_numbers<[1], [0], [0], [1], [0, 0, 1, 1], [], []>} : vector<16x8xbf16>, vector<8x128xbf16>, vector<16x128xf32> -> vector<16x128xf32>
    %26 = vector.extract_strided_slice %25 {offsets = [0, 32], sizes = [16, 1], strides = [1, 1]} : vector<16x128xf32> to vector<16x1xf32>
    %27 = vector.extract_strided_slice %25 {offsets = [0, 0], sizes = [16, 32], strides = [1, 1]} : vector<16x128xf32> to vector<16x32xf32>
    %28 = tpu.reciprocal %26 {approx = true} : vector<16x1xf32> -> vector<16x1xf32>
    %29 = vector.broadcast %28 : vector<16x1xf32> to vector<16x32xf32>
    %30 = arith.mulf %27, %29 : vector<16x32xf32>
    %c0_10 = arith.constant 0 : index
    %c0_11 = arith.constant 0 : index
    %c0_12 = arith.constant 0 : index
    %31 = vector.load %arg5[%c0_10, %c0_11, %c0_12] : memref<1x16x32xf32, #tpu.memory_space<vmem>>, vector<1x16x32xf32>
    %32 = vector.shape_cast %31 : vector<1x16x32xf32> to vector<16x32xf32>
    %33 = vector.shape_cast %30 : vector<16x32xf32> to vector<1x16x32xf32>
    tpu.vector_store %arg5[%c0_10, %c0_11, %c0_12], %33 {strides = array<i32>} : memref<1x16x32xf32, #tpu.memory_space<vmem>>, vector<1x16x32xf32>,
    return
  }
  func.func @transform_0(%arg0: i32, %arg1: i32) -> (i32, i32, i32) {
    %c0_i32 = arith.constant 0 : i32
    %c0_i32_0 = arith.constant 0 : i32
    %c0_i32_1 = arith.constant 0 : i32
    return %arg0, %c0_i32, %c0_i32_0 : i32, i32, i32
  }
  func.func @transform_1(%arg0: i32, %arg1: i32) -> (i32, i32, i32) {
    %c0_i32 = arith.constant 0 : i32
    %c0_i32_0 = arith.constant 0 : i32
    %c0_i32_1 = arith.constant 0 : i32
    return %arg0, %c0_i32, %c0_i32_0 : i32, i32, i32
  }
  func.func @transform_2(%arg0: i32, %arg1: i32) -> (i32, i32, i32) {
    %c0_i32 = arith.constant 0 : i32
    %c0_i32_0 = arith.constant 0 : i32
    %c0_i32_1 = arith.constant 0 : i32
    return %arg0, %c0_i32, %c0_i32_0 : i32, i32, i32
  }
  func.func @transform_3(%arg0: i32, %arg1: i32) -> (i32, i32, i32) {
    %c0_i32 = arith.constant 0 : i32
    %c0_i32_0 = arith.constant 0 : i32
    return %arg0, %arg1, %c0_i32 : i32, i32, i32
  }
}

</mosaic_0001>

<llo_original>
// kernel: tpu_custom_call.1
$region0: #{tpu_custom_call.1}
  #allocation0 [shape = 'u32[]', space=smem, size = 0x4, offset = 0x4, fixed_abs, tag = 'smem constant byte address 0x4 - core index']
  #allocation1 [shape = 'u32[144,128]{1,0:T(1,128)}', space=vmem, size = 0x12000, scoped, tag = 'internal scratch']
  %s0 = inlined_call_operand.hbm [shape: f32[2,1,8], index: 0, kind: input, shape index: {}]
  %s1 = inlined_call_operand.hbm [shape: f32[2,1,8], index: 1, kind: input, shape index: {}]
  %s2 = inlined_call_operand.hbm [shape: bf16[2,8,128], index: 2, kind: input, shape index: {}]
  %s3 = inlined_call_operand.hbm [shape: f32[2,16,32], index: 3, kind: output, shape index: {}]
  %s4 = sld [smem:[#allocation0]]
  $region57: #{tpu_custom_call.1} parent=0
    _
  %s6 = ssub.s32 1, %s4
  %s7 = scalar_select 0, %s6, %s4
  $region1: #{tpu_custom_call.1} parent=0
    #allocation2 [shape = 'u8[1024]{0}', space=vmem, size = 0x400, scoped, tag = 'input window, operand 0']
    #allocation3 [shape = 's32[2]{0}', space=sflag, size = 0x8, scoped, tag = 'scoped memory for tpu_custom_call.1']
    #allocation4 [shape = 's32[2]{0}', space=sflag, size = 0x8, scoped, tag = 'scoped memory for tpu_custom_call.1']
    #allocation5 [shape = 'u8[1024]{0}', space=vmem, size = 0x400, scoped, tag = 'input window, operand 1']
    #allocation6 [shape = 's32[2]{0}', space=sflag, size = 0x8, scoped, tag = 'scoped memory for tpu_custom_call.1']
    #allocation7 [shape = 'u8[4096]{0}', space=vmem, size = 0x1000, scoped, tag = 'input window, operand 2']
    #allocation8 [shape = 'u8[16384]{0}', space=vmem, size = 0x4000, scoped, tag = 'output window, operand 0']
    %8 = vsyncpa [#allocation3], 0
    %s9 = scalar_lea.sflag [#allocation3], 1
    %10 = vsyncpa %s9, 0
    %11 = vsyncpa [#allocation6], 0
    %s12 = scalar_lea.sflag [#allocation6], 1
    %13 = vsyncpa %s12, 0
    %14 = vsyncpa [#allocation4], 0
    %s15 = scalar_lea.sflag [#allocation4], 1
    %16 = vsyncpa %s15, 0
    loop: start=0, step=1, limit=4
    $region2: #{tpu_custom_call.1} parent=1 // loop_pre_header
      _
    $region3: #{tpu_custom_call.1} parent=1 // loop_header
      %s18 = sphi 0, %s22
      %p19 = scmp.ge.s32.totalorder %s18, 4
      %s25 = sphi 0, %s37
      %s26 = sphi 0, %s33
      %s27 = sphi 0, %s25
      %s28 = sphi 0, %s26
      %s29 = sphi 0, %s27
      %s30 = sphi 0, %s28
      %s40 = sphi 0, %s42
      %s43 = sphi 0, %s40
      %s44 = sphi 0, %s43
      %s60 = sphi 0, %s44
      %s66 = sphi 0, %s68
      %s69 = sphi 0, %s66
      %s70 = sphi 0, %s69
      %s86 = sphi 0, %s70
      %s92 = sphi 0, %s94
      %s95 = sphi 0, %s92
      %s96 = sphi 0, %s95
      %s112 = sphi 0, %s96
      %s120 = sphi 0, %s122
      %s123 = sphi 0, %s120
      %s124 = sphi 0, %s123
      %s140 = sphi 0, %s124
    $region4: #{tpu_custom_call.1} parent=1 // loop_header_branch
      %21 = sbr.rel (%p19) target = $region8
    $region5: #{tpu_custom_call.1} parent=1 // loop_body
      %s23 = ssub.s32 %s18, 1
      %s24 = ssub.s32 %s18, 2
      %s31 = sadd.s32 1, %s26
      %p32 = scmp.ge.s32.totalorder %s31, 1
      %s33 = scalar_select %p32, 0, %s31
      %s34 = sadd.s32 1, %s25
      %s35 = scalar_select %p32, %s34, %s25
      %p36 = scmp.ge.s32.totalorder %s35, 2
      %s37 = scalar_select %p36, 0, %s35
      %s38 = ssub.s32 %s25, %s37
      %p39 = scmp.eq.s32.totalorder %s38, 0
      %s41 = sadd.s32 %s40, 1
      %s42 = scalar_select %p39, %s40, %s41
      %p45 = pneg %p39
      %p46 = scmp.eq.s32.totalorder %s18, 1
      %p47 = por %p45, %p46
      %p48 = scmp.ne.s32.totalorder %s40, %s43
      %p49 = scmp.eq.s32.totalorder %s18, 0
      %p50 = por %p48, %p49
      %p51 = scmp.ne.s32.totalorder %s40, %s43
      %p52 = scmp.eq.s32.totalorder %s23, 1
      %p53 = por %p51, %p52
      %p54 = scmp.ne.s32.totalorder %s43, %s44
      %p55 = scmp.eq.s32.totalorder %s23, 0
      %p56 = por %p54, %p55
      %p57 = scmp.ne.s32.totalorder %s43, %s44
      %p58 = scmp.eq.s32.totalorder %s24, 1
      %p59 = por %p57, %p58
      %p61 = scmp.ne.s32.totalorder %s44, %s60
      %p62 = scmp.eq.s32.totalorder %s24, 0
      %p63 = por %p61, %p62
      %s64 = ssub.s32 %s25, %s37
      %p65 = scmp.eq.s32.totalorder %s64, 0
      %s67 = sadd.s32 %s66, 1
      %s68 = scalar_select %p65, %s66, %s67
      %p71 = pneg %p65
      %p72 = scmp.eq.s32.totalorder %s18, 1
      %p73 = por %p71, %p72
      %p74 = scmp.ne.s32.totalorder %s66, %s69
      %p75 = scmp.eq.s32.totalorder %s18, 0
      %p76 = por %p74, %p75
      %p77 = scmp.ne.s32.totalorder %s66, %s69
      %p78 = scmp.eq.s32.totalorder %s23, 1
      %p79 = por %p77, %p78
      %p80 = scmp.ne.s32.totalorder %s69, %s70
      %p81 = scmp.eq.s32.totalorder %s23, 0
      %p82 = por %p80, %p81
      %p83 = scmp.ne.s32.totalorder %s69, %s70
      %p84 = scmp.eq.s32.totalorder %s24, 1
      %p85 = por %p83, %p84
      %p87 = scmp.ne.s32.totalorder %s70, %s86
      %p88 = scmp.eq.s32.totalorder %s24, 0
      %p89 = por %p87, %p88
      %s90 = ssub.s32 %s25, %s37
      %p91 = scmp.eq.s32.totalorder %s90, 0
      %s93 = sadd.s32 %s92, 1
      %s94 = scalar_select %p91, %s92, %s93
      %p97 = pneg %p91
      %p98 = scmp.eq.s32.totalorder %s18, 1
      %p99 = por %p97, %p98
      %p100 = scmp.ne.s32.totalorder %s92, %s95
      %p101 = scmp.eq.s32.totalorder %s18, 0
      %p102 = por %p100, %p101
      %p103 = scmp.ne.s32.totalorder %s92, %s95
      %p104 = scmp.eq.s32.totalorder %s23, 1
      %p105 = por %p103, %p104
      %p106 = scmp.ne.s32.totalorder %s95, %s96
      %p107 = scmp.eq.s32.totalorder %s23, 0
      %p108 = por %p106, %p107
      %p109 = scmp.ne.s32.totalorder %s95, %s96
      %p110 = scmp.eq.s32.totalorder %s24, 1
      %p111 = por %p109, %p110
      %p113 = scmp.ne.s32.totalorder %s96, %s112
      %p114 = scmp.eq.s32.totalorder %s24, 0
      %p115 = por %p113, %p114
      %s116 = ssub.s32 %s25, %s37
      %s117 = ssub.s32 %s26, %s33
      %s118 = sor.u32 %s116, %s117
      %p119 = scmp.eq.s32.totalorder %s118, 0
      %s121 = sadd.s32 %s120, 1
      %s122 = scalar_select %p119, %s120, %s121
      %p125 = pneg %p119
      %p126 = scmp.eq.s32.totalorder %s18, 1
      %p127 = por %p125, %p126
      %p128 = scmp.ne.s32.totalorder %s120, %s123
      %p129 = scmp.eq.s32.totalorder %s18, 0
      %p130 = por %p128, %p129
      %p131 = scmp.ne.s32.totalorder %s120, %s123
      %p132 = scmp.eq.s32.totalorder %s23, 1
      %p133 = por %p131, %p132
      %p134 = scmp.ne.s32.totalorder %s123, %s124
      %p135 = scmp.eq.s32.totalorder %s23, 0
      %p136 = por %p134, %p135
      %p137 = scmp.ne.s32.totalorder %s123, %s124
      %p138 = scmp.eq.s32.totalorder %s24, 1
      %p139 = por %p137, %p138
      %p141 = scmp.ne.s32.totalorder %s124, %s140
      %p142 = scmp.eq.s32.totalorder %s24, 0
      %p143 = por %p141, %p142
      %p144 = scmp.le.s32.totalorder 1, %s18
      %p145 = scmp.lt.s32.totalorder %s18, 3
      %p146 = pnand %p144, %p145
      %p147 = pneg %p146
      // Predicated region
      $region9: #{tpu_custom_call.1} parent=5 // pred_check
        _
      $region10: #{tpu_custom_call.1} parent=5 // pred_check_branch
        %149 = sbr.rel (%p146) target = $region12
      $region11: #{tpu_custom_call.1} parent=5 // pred_region
        %s150 = ssub.s32 %s18, 1
      $region12: #{tpu_custom_call.1} parent=5 // pred_fallthru
        _
      %p151 = scmp.lt.s32.totalorder %s18, 2
      // Predicated region
      $region13: #{tpu_custom_call.1} parent=5 // pred_check
        %p152 = pneg %p151
      $region14: #{tpu_custom_call.1} parent=5 // pred_check_branch
        %154 = sbr.rel (%p152) target = $region16
      $region15: #{tpu_custom_call.1} parent=5 // pred_region
        // Predicated region
        $region17: #{tpu_custom_call.1} parent=15 // pred_check
          %p155 = pneg %p50
        $region18: #{tpu_custom_call.1} parent=15 // pred_check_branch
          %157 = sbr.rel (%p155) target = $region20
        $region19: #{tpu_custom_call.1} parent=15 // pred_region
          %s158 = sand.u32 %s40, 1
          %s159 = scalar_lea.sflag [#allocation3], %s158
          %s160 = sand.u32 %s40, 1
          %s161 = scalar_lea.vmem [#allocation2], %s160
          %s163 = ssub.s32 16, 16
          %164 = vsyncadd %s159, %s163
          %s165 = smul.addr %s25, 16
          %s166 = scalar_lea.hbm %s0, %s165
          %s168 = sshll.u32 %s161, 4
          %s169 = int_to_ptr.vmem [resolvable:$true] %s168
          %171 = dma.hbm_to_vmem [thread:$0]  %s166, 16, %s169, %s159
        $region20: #{tpu_custom_call.1} parent=15 // pred_fallthru
          _
        // Predicated region
        $region21: #{tpu_custom_call.1} parent=15 // pred_check
          %p172 = pneg %p76
        $region22: #{tpu_custom_call.1} parent=15 // pred_check_branch
          %174 = sbr.rel (%p172) target = $region24
        $region23: #{tpu_custom_call.1} parent=15 // pred_region
          %s175 = sand.u32 %s18, 1
          %s176 = scalar_lea.sflag [#allocation6], %s175
          %s177 = sand.u32 %s66, 1
          %s178 = scalar_lea.vmem [#allocation5], %s177
          %s180 = ssub.s32 16, 16
          %181 = vsyncadd %s176, %s180
          %s182 = smul.addr %s25, 16
          %s183 = scalar_lea.hbm %s1, %s182
          %s185 = sshll.u32 %s178, 4
          %s186 = int_to_ptr.vmem [resolvable:$true] %s185
          %188 = dma.hbm_to_vmem [thread:$0]  %s183, 16, %s186, %s176
        $region24: #{tpu_custom_call.1} parent=15 // pred_fallthru
          _
        // Predicated region
        $region25: #{tpu_custom_call.1} parent=15 // pred_check
          %p189 = pneg %p102
        $region26: #{tpu_custom_call.1} parent=15 // pred_check_branch
          %191 = sbr.rel (%p189) target = $region28
        $region27: #{tpu_custom_call.1} parent=15 // pred_region
          %s192 = sand.u32 %s18, 1
          %s193 = scalar_lea.sflag [#allocation6], %s192
          %s194 = sand.u32 %s92, 1
          %s195 = smul.addr %s194, 4
          %s196 = scalar_lea.vmem [#allocation7], %s195
          %s198 = ssub.s32 64, 64
          %199 = vsyncadd %s193, %s198
          %s200 = smul.addr %s25, 64
          %s201 = scalar_lea.hbm %s2, %s200
          %s203 = sshll.u32 %s196, 4
          %s204 = int_to_ptr.vmem [resolvable:$true] %s203
          %206 = dma.hbm_to_vmem [thread:$0]  %s201, 64, %s204, %s193
        $region28: #{tpu_custom_call.1} parent=15 // pred_fallthru
          _
      $region16: #{tpu_custom_call.1} parent=5 // pred_fallthru
        _
      %p207 = scmp.le.s32.totalorder 1, %s18
      %p208 = scmp.lt.s32.totalorder %s18, 3
      %p209 = pnand %p207, %p208
      %p210 = pneg %p209
      // Predicated region
      $region29: #{tpu_custom_call.1} parent=5 // pred_check
        _
      $region30: #{tpu_custom_call.1} parent=5 // pred_check_branch
        %212 = sbr.rel (%p209) target = $region32
      $region31: #{tpu_custom_call.1} parent=5 // pred_region
        %s213 = ssub.s32 %s18, 1
        %s214 = sand.u32 %s43, 1
        %s215 = scalar_lea.sflag [#allocation3], %s214
        %s216 = sand.u32 %s43, 1
        %s217 = scalar_lea.vmem [#allocation2], %s216
        // Predicated region
        $region33: #{tpu_custom_call.1} parent=31 // pred_check
          %p218 = pneg %p56
        $region34: #{tpu_custom_call.1} parent=31 // pred_check_branch
          %220 = sbr.rel (%p218) target = $region36
        $region35: #{tpu_custom_call.1} parent=31 // pred_region
          %221 = dma.done %s215, 16
        $region36: #{tpu_custom_call.1} parent=31 // pred_fallthru
          _
        %s222 = sand.u32 %s23, 1
        %s223 = scalar_lea.sflag [#allocation6], %s222
        %s224 = sand.u32 %s69, 1
        %s225 = scalar_lea.vmem [#allocation5], %s224
        // Predicated region
        $region37: #{tpu_custom_call.1} parent=31 // pred_check
          %p226 = pneg %p82
        $region38: #{tpu_custom_call.1} parent=31 // pred_check_branch
          %228 = sbr.rel (%p226) target = $region40
        $region39: #{tpu_custom_call.1} parent=31 // pred_region
          %229 = dma.done %s223, 16
        $region40: #{tpu_custom_call.1} parent=31 // pred_fallthru
          _
        %s230 = sand.u32 %s23, 1
        %s231 = scalar_lea.sflag [#allocation6], %s230
        %s232 = sand.u32 %s95, 1
        %s233 = smul.addr %s232, 4
        %s234 = scalar_lea.vmem [#allocation7], %s233
        // Predicated region
        $region41: #{tpu_custom_call.1} parent=31 // pred_check
          %p235 = pneg %p108
        $region42: #{tpu_custom_call.1} parent=31 // pred_check_branch
          %237 = sbr.rel (%p235) target = $region44
        $region43: #{tpu_custom_call.1} parent=31 // pred_region
          %238 = dma.done %s231, 64
        $region44: #{tpu_custom_call.1} parent=31 // pred_fallthru
          _
        %s239 = sand.u32 %s43, 1
        %s240 = scalar_lea.sflag [#allocation3], %s239
        %s241 = sand.u32 %s43, 1
        %s242 = scalar_lea.vmem [#allocation2], %s241
        %p243 = pneg %p56
        %p244 = pneg %p53
        %s245 = sand.u32 %s23, 1
        %s246 = scalar_lea.sflag [#allocation6], %s245
        %s247 = sand.u32 %s69, 1
        %s248 = scalar_lea.vmem [#allocation5], %s247
        %p249 = pneg %p82
        %p250 = pneg %p79
        %s251 = sand.u32 %s23, 1
        %s252 = scalar_lea.sflag [#allocation6], %s251
        %s253 = sand.u32 %s95, 1
        %s254 = smul.addr %s253, 4
        %s255 = scalar_lea.vmem [#allocation7], %s254
        %p256 = pneg %p108
        %p257 = pneg %p105
        %p258 = pneg %p136
        %p259 = pneg %p133
        %s260 = sand.u32 %s123, 1
        %s261 = scalar_lea.sflag [#allocation4], %s260
        %s262 = sand.u32 %s123, 1
        %s263 = smul.addr %s262, 16
        %s264 = scalar_lea.vmem [#allocation8], %s263
        %s265 = smul.u32 2, %s28
        %s267 = smul.u32 %s28, 16
        %v268 = vld [vmem:[%s217] sm:$0x1]
        %v269 = vld [vmem:[%s225] sm:$0x1]
        %v270 = vlaneseq
        %v271 = vshrl.u32 %v270, 7
        %v272 = vadd.s32 %v271, 8
        %v273 = vstv %s267
        %v274 = vadd.s32 %v271, %v273
        %v275 = vadd.s32 %v272, %v273
        %v276 = vcvt.s32.f32 %v274
        %v277 = vcvt.s32.f32 %v275
        %v279 = vlaneseq
        %v280 = vshrl.u32 %v279, 7
        %v281 = vsub.s32 0, %v280
        %v282 = vrot.slane %v268, %v281
        %v284 = vsub.f32 %v276, %v282
        %v285 = vsub.f32 %v277, %v282
        %v286 = vmul.f32 %v284, %v284
        %v287 = vmul.f32 %v285, %v285
        %v288 = vmul.f32 %v286, -0.5
        %v289 = vmul.f32 %v287, -0.5
        %v291 = vlaneseq
        %v292 = vshrl.u32 %v291, 7
        %v293 = vsub.s32 0, %v292
        %v294 = vrot.slane %v269, %v293
        %v296 = vadd.f32 %v288, %v294
        %v297 = vadd.f32 %v289, %v294
        %vm298 = vcmask 64512
        %v299 = vsel %vm298, %v296, -inf
        %300 = vmax.xlane.f32.xlu0 %v299
        %v301 = vpop.xlane.xlu0 %300
        %v302 = vsel %vm298, %v297, -inf
        %303 = vmax.xlane.f32.xlu0 %v302
        %v304 = vpop.xlane.xlu0 %303
        %v305 = vsub.f32 %v296, %v301
        %v306 = vsub.f32 %v297, %v304
        %v307 = vmul.f32 %v305, 1.442695
        %v308 = vpow.pop %v307
        %v309 = vmul.f32 %v306, 1.442695
        %v310 = vpow.pop %v309
        %v311 = vpack.c.bf16 %v310, %v308
        %v312 = vld [vmem:[%s234] sm:$0xf]
        %v314 = vsel %vm298, %v311, 0
        %vm316 = vcmask 1043456
        %v318 = vsel %vm316, %v312, 0
        %320 = vmatprep.subr.bf16.mxu0 0
        %321 = vmatpush1.bf16.msra.mxu0 0
        %322 = vmatprep.subr.bf16.mxu0 0
        %323 = vmatpush1.bf16.msra.mxu0 0
        %324 = vmatprep.subr.bf16.mxu0 0
        %325 = vmatpush1.bf16.msra.mxu0 0
        %326 = vmatprep.subr.bf16.mxu0 0
        %327 = vmatpush1.bf16.msra.mxu0 0
        %328 = vmatprep.subr.bf16.mxu0 0
        %329 = vmatpush1.bf16.msra.mxu0 0
        %330 = vmatprep.subr.bf16.mxu0 0
        %331 = vmatpush1.bf16.msra.mxu0 0
        %332 = vmatprep.subr.bf16.mxu0 0
        %333 = vmatpush1.bf16.msra.mxu0 0
        %334 = vmatprep.subr.bf16.mxu0 0
        %335 = vmatpush1.bf16.msra.mxu0 %v318
        %336 = vmatprep.subr.bf16.mxu0 0
        %337 = vmatpush2.bf16.msra.mxu0 0
        %338 = vmatprep.subr.bf16.mxu0 0
        %339 = vmatpush2.bf16.msra.mxu0 0
        %340 = vmatprep.subr.bf16.mxu0 0
        %341 = vmatpush2.bf16.msra.mxu0 0
        %342 = vmatprep.subr.bf16.mxu0 0
        %343 = vmatpush2.bf16.msra.mxu0 0
        %344 = vmatprep.subr.bf16.mxu0 0
        %345 = vmatpush2.bf16.msra.mxu0 0
        %346 = vmatprep.subr.bf16.mxu0 0
        %347 = vmatpush2.bf16.msra.mxu0 0
        %348 = vmatprep.subr.bf16.mxu0 0
        %349 = vmatpush2.bf16.msra.mxu0 0
        %350 = vmatprep.subr.bf16.mxu0 0
        %351 = vmatpush2.bf16.msra.mxu0 0
        %352 = vmatprep.mubr.bf16.mxu0 0
        %353 = vmatmul.mubr.bf16.gmra.mxu0 %v314
        %v354 = vpop.f32.mrf.mxu0
        %v355 = vadd.f32 0.0, %v354
        %v356 = vpop.f32.mrf.mxu0
        %v357 = vpop.f32.mrf.mxu0
        %v358 = vadd.f32 0.0, %v357
        %v359 = vpop.f32.mrf.mxu0
        %360 = vdwg.mxu0
        %v361 = vrcp.pop %v355
        %v362 = vrcp.pop %v358
        %364 = vset.pattern.permute.xlu0 32
        %365 = vperm.xlu0 %364, %v361
        %v366 = vpop.permute.xlu0 %365
        %369 = vset.pattern.permute.xlu0 32
        %370 = vperm.xlu0 %369, %v362
        %v371 = vpop.permute.xlu0 %370
        %v373 = vmul.f32 %v355, %v366
        %v374 = vmul.f32 %v358, %v371
        %vm375 = vcmask 261120
        %376 = vst.msk [vmem:[%s264] sm:$0xff] %vm375, %v373
        %377 = vst.msk [vmem:[%s264 + $0x8] sm:$0xff] %vm375, %v374
        %s378 = sand.u32 %s123, 1
        %s379 = scalar_lea.sflag [#allocation4], %s378
        %s380 = sand.u32 %s123, 1
        %s381 = smul.addr %s380, 16
        %s382 = scalar_lea.vmem [#allocation8], %s381
        // Predicated region
        $region45: #{tpu_custom_call.1} parent=31 // pred_check
          %p383 = pneg %p133
        $region46: #{tpu_custom_call.1} parent=31 // pred_check_branch
          %385 = sbr.rel (%p383) target = $region48
        $region47: #{tpu_custom_call.1} parent=31 // pred_region
          %s386 = smul.u32 2, %s28
          %s388 = ssub.s32 256, 256
          %389 = vsyncadd %s379, %s388
          %s390 = smul.addr %s27, 2
          %s391 = sadd.s32 %s386, %s390
          %s392 = smul.addr %s391, 128
          %s393 = scalar_lea.hbm %s3, %s392
          %s394 = sshll.u32 %s382, 4
          %s395 = int_to_ptr.vmem [resolvable:$true] %s394
          %400 = dma.vmem_to_hbm [thread:$0]  %s395, 256, %s393, %s379, 128, 128, 8
        $region48: #{tpu_custom_call.1} parent=31 // pred_fallthru
          _
      $region32: #{tpu_custom_call.1} parent=5 // pred_fallthru
        _
      %p401 = scmp.le.s32.totalorder 2, %s18
      // Predicated region
      $region49: #{tpu_custom_call.1} parent=5 // pred_check
        %p402 = pneg %p401
      $region50: #{tpu_custom_call.1} parent=5 // pred_check_branch
        %404 = sbr.rel (%p402) target = $region52
      $region51: #{tpu_custom_call.1} parent=5 // pred_region
        %s405 = ssub.s32 %s18, 2
        // Predicated region
        $region53: #{tpu_custom_call.1} parent=51 // pred_check
          %p406 = pneg %p139
        $region54: #{tpu_custom_call.1} parent=51 // pred_check_branch
          %408 = sbr.rel (%p406) target = $region56
        $region55: #{tpu_custom_call.1} parent=51 // pred_region
          %s409 = sand.u32 %s124, 1
          %s410 = scalar_lea.sflag [#allocation4], %s409
          %s411 = sand.u32 %s124, 1
          %s412 = smul.addr %s411, 16
          %s413 = scalar_lea.vmem [#allocation8], %s412
          %414 = dma.done %s410, 256
        $region56: #{tpu_custom_call.1} parent=51 // pred_fallthru
          _
      $region52: #{tpu_custom_call.1} parent=5 // pred_fallthru
        _
    $region6: #{tpu_custom_call.1} parent=1 // loop_footer
      %s22 = sadd.s32 1, %s18
    $region7: #{tpu_custom_call.1} parent=1 // loop_footer_branch
      %17 = sbr.rel target = $region3
    $region8: #{tpu_custom_call.1} parent=1 // loop_exit
      _
    %415 = vsyncpa [#allocation3], 1
    %s416 = scalar_lea.sflag [#allocation3], 1
    %417 = vsyncpa %s416, 1
    %418 = vsyncpa [#allocation6], 1
    %s419 = scalar_lea.sflag [#allocation6], 1
    %420 = vsyncpa %s419, 1
    %421 = vsyncpa [#allocation4], 1
    %s422 = scalar_lea.sflag [#allocation4], 1
    %423 = vsyncpa %s422, 1

</llo_original>
